<compile_context>
chip_gen: v7x
topology: tpu7x:2x2x1
jax: 0.10.0
libtpu: 0.0.40
codegen_flags: <defaults>
</compile_context>

<pallas_src>
import jax
import jax.numpy as jnp
import numpy as np
from jax.experimental import pallas as pl
from jax.experimental.pallas import tpu as pltpu

P_HIGH = jax.lax.Precision.HIGHEST  # XLA-side (reference + host-side weight fold) numerics


# ----------------------------------------------------------------------------
# Host-side, one-time parameter fusion / packing
# ----------------------------------------------------------------------------
def fuse_block_params(g1, b1, wc, bc, wp1, bp1,          # ln1 + causal self-attn
                      wv, bv, wp2, bp2,                  # cross-attn (ln2 is dead code)
                      g3, b3, w1, b1f, w2, b2f,          # ln3 + MLP
                      *, B, T, T_MEM, n_head):
    """Fold masks / Linears and pack parameters into a few DMA-friendly arrays."""
    C = wc.shape[0]
    assert C % n_head == 0
    assert T_MEM == 49, "CrossAttention attn_mask is hard-coded to 49 memory tokens"

    # (a) per-head causal-mean mask is head-independent -> shared (T, T) mask,
    #     block-diagonal over the batch so it applies to flattened (B*T, C).
    tri = np.tril(np.ones((T, T), dtype=np.float32))
    sa_mask = tri / tri.sum(axis=1, keepdims=True)
    msa = np.kron(np.eye(B, dtype=np.float32), sa_mask)                 # (B*T, B*T)

    # (b) constant 1/49 cross mask == per-batch mean over mem tokens; fold the
    #     1/49 scale + batch blocks into one selector, zero-padded to a
    #     sublane multiple (no masking needed in the MXU contraction).
    BM = B * T_MEM
    BMp = ((BM + 7) // 8) * 8
    sel = np.kron(np.eye(B, dtype=np.float32),
                  np.full((T, T_MEM), 1.0 / T_MEM, dtype=np.float32))   # (B*T, BM)
    msel = np.zeros((B * T, BMp), dtype=np.float32)
    msel[:, :BM] = sel

    # (c) fold wv and proj of the cross-attention around the mean.
    wf = jnp.matmul(wv.T, wp2.T, precision=P_HIGH)                      # (C, C)
    bf = jnp.matmul(bv, wp2.T, precision=P_HIGH) + bp2                  # (C,)

    # (d) pack: one stacked (3C, C) weight DMA + one (8, C) vector DMA.
    wcc = jnp.concatenate([wc.T, wp1.T, wf], axis=0)                    # (3C, C)
    vecs = jnp.stack([g1, b1, bc, bp1, bf, g3, b3, b2f], axis=0)        # (8, C)

    return dict(
        msa=jnp.asarray(msa), msel=jnp.asarray(msel),
        wcc=wcc, w1t=w1.T, w2t=w2.T, vecs=vecs, b1f=b1f.reshape(1, -1),
        bm_pad=BMp,
    )


# ----------------------------------------------------------------------------
# Kernel
# ----------------------------------------------------------------------------
def block_kernel(x_ref, mem_ref, msa_ref, msel_ref, wcc_ref,
                 w1t_ref, w2t_ref, vec_ref, b1f_ref, o_ref):
    f32 = jnp.float32
    C = x_ref.shape[-1]

    def layernorm(h, g, b):
        mu = jnp.mean(h, axis=-1, keepdims=True)
        d = h - mu
        var = jnp.mean(d * d, axis=-1, keepdims=True)
        return d * jax.lax.rsqrt(var + 1e-5) * g + b

    def erf(z):
        # Abramowitz & Stegun 7.1.26, |err| <= 1.5e-7 -- exact-GELU semantics
        # without relying on an erf lowering (VPU + one EUP exp only).
        t = 1.0 / (1.0 + 0.3275911 * jnp.abs(z))
        poly = ((((1.061405429 * t - 1.453152027) * t + 1.421413741) * t
                 - 0.284496736) * t + 0.254829592) * t
        e = 1.0 - poly * jnp.exp(-z * z)
        return jnp.where(z >= 0, e, -e)

    x = x_ref[...].astype(f32)                       # (B*T, C)
    vec = vec_ref[...]                               # (8, C) packed LN / bias vectors
    g1, b1 = vec[0:1], vec[1:2]
    bc, bp1 = vec[2:3], vec[3:4]
    bf = vec[4:5]
    g3, b3 = vec[5:6], vec[6:7]
    b2f = vec[7:8]
    wcc = wcc_ref[...]                               # (3C, C): [Wc^T ; Wp1^T ; Wf]
    wct, wp1t, wf = wcc[0:C], wcc[C:2 * C], wcc[2 * C:3 * C]

    # --- x = x + self_attn(ln1(x)) : head split is a no-op under the shared
    #     causal-mean mask, folded into the block-diagonal msa matrix.
    h = layernorm(x, g1, b1)
    v = jnp.dot(h, wct, preferred_element_type=f32) + bc
    y = jnp.dot(msa_ref[...], v, preferred_element_type=f32)
    x = x + jnp.dot(y, wp1t, preferred_element_type=f32) + bp1

    # --- x = x + cross_attn(ln2(x), mem) : cross_attn ignores its x values, so
    #     ln2 is dead code; 1/49 mask folded into msel, wv/proj folded into wf/bf.
    m = jnp.dot(msel_ref[...], mem_ref[...].astype(f32), preferred_element_type=f32)
    x = x + jnp.dot(m, wf, preferred_element_type=f32) + bf

    # --- x = x + mlp(ln3(x)) : Linear -> exact GELU -> Linear (dropout = identity)
    h = layernorm(x, g3, b3)
    u = jnp.dot(h, w1t_ref[...], preferred_element_type=f32) + b1f_ref[...]
    u = 0.5 * u * (1.0 + erf(u * 0.7071067811865476))
    x = x + jnp.dot(u, w2t_ref[...], preferred_element_type=f32) + b2f

    o_ref[...] = x.astype(o_ref.dtype)


# ----------------------------------------------------------------------------
# Wrapper
# ----------------------------------------------------------------------------
def block_forward(x, mem, freqs_cis, fused):
    """x: (B, T, C), mem: (B, 49, C), freqs_cis: accepted for API parity (unused).
    `fused` comes from fuse_block_params(). Returns (B, T, C)."""
    del freqs_cis  # TODO(synk): unused -- CausalSelfAttention.forward takes no freqs_cis
    B, T, C = x.shape
    T_MEM = mem.shape[1]
    assert x.shape[-1] == mem.shape[-1], "x and mem must share embedding size"
    BT = B * T
    BM = B * T_MEM
    BMp = fused["bm_pad"]
    assert fused["msa"].shape == (BT, BT), "fused params built for a different (B, T)"

    x2 = x.reshape(BT, C)
    mem2 = jnp.pad(mem.reshape(BM, C), ((0, BMp - BM), (0, 0)))

    out = pl.pallas_call(
        block_kernel,
        out_shape=jax.ShapeDtypeStruct((BT, C), x.dtype),
        grid_spec=pltpu.PrefetchScalarGridSpec(
            num_scalar_prefetch=0,
            grid=(1,),                                 # everything fits VMEM in one step
            in_specs=[
                pl.BlockSpec((BT, C), lambda i: (0, 0)),          # x  (flattened)
                pl.BlockSpec((BMp, C), lambda i: (0, 0)),         # mem (flattened, padded)
                pl.BlockSpec((BT, BT), lambda i: (0, 0)),         # block-diag causal mean
                pl.BlockSpec((BT, BMp), lambda i: (0, 0)),        # cross mean selector
                pl.BlockSpec((3 * C, C), lambda i: (0, 0)),       # [Wc^T ; Wp1^T ; Wf]
                pl.BlockSpec((C, 4 * C), lambda i: (0, 0)),       # fc1 weight^T
                pl.BlockSpec((4 * C, C), lambda i: (0, 0)),       # fc2 weight^T
                pl.BlockSpec((8, C), lambda i: (0, 0)),           # packed LN / bias vectors
                pl.BlockSpec((1, 4 * C), lambda i: (0, 0)),       # fc1 bias
            ],
            out_specs=pl.BlockSpec((BT, C), lambda i: (0, 0)),
        ),
        compiler_params=pltpu.CompilerParams(dimension_semantics=("arbitrary",)),
    )(x2, mem2, fused["msa"], fused["msel"], fused["wcc"],
      fused["w1t"], fused["w2t"], fused["vecs"], fused["b1f"])

    return out.reshape(B, T, C)


# ----------------------------------------------------------------------------
# Pure-JAX reference mirroring the PyTorch Block forward (eval mode)
# ----------------------------------------------------------------------------
def _layernorm_ref(h, g, b, eps=1e-5):
    mu = h.mean(-1, keepdims=True)
    var = ((h - mu) ** 2).mean(-1, keepdims=True)
    return (h - mu) / jnp.sqrt(var + eps) * g + b


def _self_attn_ref(h, wc, bc, wp, bp, n_head):
    B, T, C = h.shape
    hd = C // n_head
    v = jnp.matmul(h, wc.T, precision=P_HIGH) + bc
    v = v.reshape(B, T, n_head, hd).transpose(0, 2, 1, 3)
    tri = jnp.tril(jnp.ones((T, T), jnp.float32))
    mask = jnp.broadcast_to(tri / tri.sum(1, keepdims=True), (B, n_head, T, T))
    y = jnp.einsum("bhts,bhsd->bhtd", mask, v, precision=P_HIGH)
    y = y.transpose(0, 2, 1, 3).reshape(B, T, C)
    return jnp.matmul(y, wp.T, precision=P_HIGH) + bp


def _cross_attn_ref(h, mem, wv, bv, wp, bp, n_head):
    B, T, C = h.shape                  # h's values are unused, exactly as in the module
    T_MEM = mem.shape[1]
    hd = C // n_head
    v = jnp.matmul(mem, wv.T, precision=P_HIGH) + bv
    v = v.reshape(B, T_MEM, n_head, hd).transpose(0, 2, 1, 3)
    mask = jnp.full((B, n_head, T, 49), 1.0 / 49.0, jnp.float32)
    y = jnp.einsum("bhtk,bhkd->bhtd", mask, v, precision=P_HIGH)
    y = y.transpose(0, 2, 1, 3).reshape(B, T, C)
    return jnp.matmul(y, wp.T, precision=P_HIGH) + bp


def _mlp_ref(h, w1, b1, w2, b2):
    u = jnp.matmul(h, w1.T, precision=P_HIGH) + b1
    u = jax.nn.gelu(u, approximate=False)          # nn.GELU() default (exact erf)
    return jnp.matmul(u, w2.T, precision=P_HIGH) + b2


def block_reference(x, mem, freqs_cis, p):
    del freqs_cis  # CausalSelfAttention.forward takes only x
    x = x + _self_attn_ref(_layernorm_ref(x, p["g1"], p["b1"]),
                           p["wc"], p["bc"], p["wp1"], p["bp1"], p["n_head"])
    x = x + _cross_attn_ref(_layernorm_ref(x, p["g2"], p["b2"]), mem,
                            p["wv"], p["bv"], p["wp2"], p["bp2"], p["n_head"])
    x = x + _mlp_ref(_layernorm_ref(x, p["g3"], p["b3"]),
                     p["w1"], p["b1f"], p["w2"], p["b2f"])
    return x


# ----------------------------------------------------------------------------
if __name__ == "__main__":
    # cfg: n_embd=32, n_head=4, block_size=8, batch_size=2, bias=True, dropout=0.0
    B, T, C = 2, 8, 32
    T_MEM, n_head = 49, 4

    key = jax.random.PRNGKey(0)
    ks = jax.random.split(key, 24)
    uni = lambda k, shape, b: jax.random.uniform(k, shape, jnp.float32, -b, b)
    bound = 1.0 / np.sqrt(C)
    xav = np.sqrt(6.0 / (C + C))

    x = jax.random.normal(ks[0], (B, T, C), jnp.float32)
    mem = jax.random.normal(ks[1], (B, T_MEM, C), jnp.float32)
    freqs_cis = jax.random.normal(ks[2], (T, C // n_head), jnp.float32)   # unused by the module

    g1 = 1.0 + 0.05 * jax.random.normal(ks[3], (C,), jnp.float32)
    b1 = 0.05 * jax.random.normal(ks[4], (C,), jnp.float32)
    wc = uni(ks[5], (C, C), xav);    bc = uni(ks[6], (C,), bound)
    wp1 = uni(ks[7], (C, C), xav);   bp1 = uni(ks[8], (C,), bound)
    g2 = 1.0 + 0.05 * jax.random.normal(ks[9], (C,), jnp.float32)
    b2 = 0.05 * jax.random.normal(ks[10], (C,), jnp.float32)
    wv = uni(ks[11], (C, C), bound); bv = uni(ks[12], (C,), bound)
    wp2 = uni(ks[13], (C, C), xav);  bp2 = uni(ks[14], (C,), bound)
    g3 = 1.0 + 0.05 * jax.random.normal(ks[15], (C,), jnp.float32)
    b3 = 0.05 * jax.random.normal(ks[16], (C,), jnp.float32)
    w1 = uni(ks[17], (4 * C, C), bound); b1f = uni(ks[18], (4 * C,), bound)
    w2 = uni(ks[19], (C, 4 * C), xav);   b2f = uni(ks[20], (C,), 1.0 / np.sqrt(4 * C))

    fused = fuse_block_params(g1, b1, wc, bc, wp1, bp1, wv, bv, wp2, bp2,
                              g3, b3, w1, b1f, w2, b2f,
                              B=B, T=T, T_MEM=T_MEM, n_head=n_head)

    out = block_forward(x, mem, freqs_cis, fused)
    out = jax.block_until_ready(out)

    ref = block_reference(x, mem, freqs_cis, dict(
        g1=g1, b1=b1, wc=wc, bc=bc, wp1=wp1, bp1=bp1,
        g2=g2, b2=b2, wv=wv, bv=bv, wp2=wp2, bp2=bp2,
        g3=g3, b3=b3, w1=w1, b1f=b1f, w2=w2, b2f=b2f, n_head=n_head))

    np.testing.assert_allclose(np.asarray(out), np.asarray(ref), rtol=5e-5, atol=5e-5)
    print("KERNEL_OK")
</pallas_src>

<mosaic_0001>
module attributes {stable_mosaic.version = 11 : i64} {
  func.func @block_kernel(%arg0: i32, %arg1: memref<16x32xf32, #tpu.memory_space<vmem>>, %arg2: memref<104x32xf32, #tpu.memory_space<vmem>>, %arg3: memref<16x16xf32, #tpu.memory_space<vmem>>, %arg4: memref<16x104xf32, #tpu.memory_space<vmem>>, %arg5: memref<96x32xf32, #tpu.memory_space<vmem>>, %arg6: memref<32x128xf32, #tpu.memory_space<vmem>>, %arg7: memref<128x32xf32, #tpu.memory_space<vmem>>, %arg8: memref<8x32xf32, #tpu.memory_space<vmem>>, %arg9: memref<1x128xf32, #tpu.memory_space<vmem>>, %arg10: memref<16x32xf32, #tpu.memory_space<vmem>>) attributes {dimension_semantics = [#tpu.dimension_semantics<arbitrary>], iteration_bounds = array<i64: 1>, scalar_prefetch = 0 : i64, scratch_operands = 0 : i64, tpu.core_type = #tpu.core_type<tc>, window_params = [{pipeline_mode = #tpu.pipeline_mode<synchronous>, transform_indices = @transform_0, window_bounds = array<i64: 16, 32>}, {pipeline_mode = #tpu.pipeline_mode<synchronous>, transform_indices = @transform_1, window_bounds = array<i64: 104, 32>}, {pipeline_mode = #tpu.pipeline_mode<synchronous>, transform_indices = @transform_2, window_bounds = array<i64: 16, 16>}, {pipeline_mode = #tpu.pipeline_mode<synchronous>, transform_indices = @transform_3, window_bounds = array<i64: 16, 104>}, {pipeline_mode = #tpu.pipeline_mode<synchronous>, transform_indices = @transform_4, window_bounds = array<i64: 96, 32>}, {pipeline_mode = #tpu.pipeline_mode<synchronous>, transform_indices = @transform_5, window_bounds = array<i64: 32, 128>}, {pipeline_mode = #tpu.pipeline_mode<synchronous>, transform_indices = @transform_6, window_bounds = array<i64: 128, 32>}, {pipeline_mode = #tpu.pipeline_mode<synchronous>, transform_indices = @transform_7, window_bounds = array<i64: 8, 32>}, {pipeline_mode = #tpu.pipeline_mode<synchronous>, transform_indices = @transform_8, window_bounds = array<i64: 1, 128>}, {pipeline_mode = #tpu.pipeline_mode<synchronous>, transform_indices = @transform_9, window_bounds = array<i64: 16, 32>}]} {
    %c0 = arith.constant 0 : index
    %c0_0 = arith.constant 0 : index
    %0 = vector.load %arg1[%c0, %c0_0] : memref<16x32xf32, #tpu.memory_space<vmem>>, vector<16x32xf32>
    %c0_1 = arith.constant 0 : index
    %c0_2 = arith.constant 0 : index
    %1 = vector.load %arg8[%c0_1, %c0_2] : memref<8x32xf32, #tpu.memory_space<vmem>>, vector<8x32xf32>
    %2 = vector.extract_strided_slice %1 {offsets = [0, 0], sizes = [1, 32], strides = [1, 1]} : vector<8x32xf32> to vector<1x32xf32>
    %3 = vector.extract_strided_slice %1 {offsets = [1, 0], sizes = [1, 32], strides = [1, 1]} : vector<8x32xf32> to vector<1x32xf32>
    %4 = vector.extract_strided_slice %1 {offsets = [2, 0], sizes = [1, 32], strides = [1, 1]} : vector<8x32xf32> to vector<1x32xf32>
    %5 = vector.extract_strided_slice %1 {offsets = [3, 0], sizes = [1, 32], strides = [1, 1]} : vector<8x32xf32> to vector<1x32xf32>
    %6 = vector.extract_strided_slice %1 {offsets = [4, 0], sizes = [1, 32], strides = [1, 1]} : vector<8x32xf32> to vector<1x32xf32>
    %7 = vector.extract_strided_slice %1 {offsets = [5, 0], sizes = [1, 32], strides = [1, 1]} : vector<8x32xf32> to vector<1x32xf32>
    %8 = vector.extract_strided_slice %1 {offsets = [6, 0], sizes = [1, 32], strides = [1, 1]} : vector<8x32xf32> to vector<1x32xf32>
    %9 = vector.extract_strided_slice %1 {offsets = [7, 0], sizes = [1, 32], strides = [1, 1]} : vector<8x32xf32> to vector<1x32xf32>
    %c0_3 = arith.constant 0 : index
    %c0_4 = arith.constant 0 : index
    %10 = vector.load %arg5[%c0_3, %c0_4] : memref<96x32xf32, #tpu.memory_space<vmem>>, vector<96x32xf32>
    %11 = vector.extract_strided_slice %10 {offsets = [0, 0], sizes = [32, 32], strides = [1, 1]} : vector<96x32xf32> to vector<32x32xf32>
    %12 = vector.extract_strided_slice %10 {offsets = [32, 0], sizes = [32, 32], strides = [1, 1]} : vector<96x32xf32> to vector<32x32xf32>
    %13 = vector.extract_strided_slice %10 {offsets = [64, 0], sizes = [32, 32], strides = [1, 1]} : vector<96x32xf32> to vector<32x32xf32>
    %cst = arith.constant dense<0.000000e+00> : vector<16xf32>
    %14 = vector.multi_reduction <add>, %0, %cst [1] : vector<16x32xf32> to vector<16xf32>
    %15 = vector.shape_cast %14 : vector<16xf32> to vector<16x1xf32>
    %cst_5 = arith.constant 3.200000e+01 : f32
    %16 = vector.broadcast %cst_5 : f32 to vector<16x1xf32>
    %17 = arith.divf %15, %16 : vector<16x1xf32>
    %18 = vector.broadcast %17 : vector<16x1xf32> to vector<16x32xf32>
    %19 = arith.subf %0, %18 : vector<16x32xf32>
    %20 = arith.mulf %19, %19 : vector<16x32xf32>
    %cst_6 = arith.constant dense<0.000000e+00> : vector<16xf32>
    %21 = vector.multi_reduction <add>, %20, %cst_6 [1] : vector<16x32xf32> to vector<16xf32>
    %22 = vector.shape_cast %21 : vector<16xf32> to vector<16x1xf32>
    %cst_7 = arith.constant 3.200000e+01 : f32
    %23 = vector.broadcast %cst_7 : f32 to vector<16x1xf32>
    %24 = arith.divf %22, %23 : vector<16x1xf32>
    %cst_8 = arith.constant 9.99999974E-6 : f32
    %25 = vector.broadcast %cst_8 : f32 to vector<16x1xf32>
    %26 = arith.addf %24, %25 : vector<16x1xf32>
    %27 = math.rsqrt %26 : vector<16x1xf32>
    %28 = vector.broadcast %27 : vector<16x1xf32> to vector<16x32xf32>
    %29 = arith.mulf %19, %28 : vector<16x32xf32>
    %30 = vector.broadcast %2 : vector<1x32xf32> to vector<16x32xf32>
    %31 = arith.mulf %29, %30 : vector<16x32xf32>
    %32 = vector.broadcast %3 : vector<1x32xf32> to vector<16x32xf32>
    %33 = arith.addf %31, %32 : vector<16x32xf32>
    %cst_9 = arith.constant dense<0.000000e+00> : vector<16x32xf32>
    %34 = tpu.matmul %33, %11, %cst_9 {dimension_numbers = #tpu.dot_dimension_numbers<[1], [0], [0], [1], [0, 0, 1, 1], [], []>} : vector<16x32xf32>, vector<32x32xf32>, vector<16x32xf32> -> vector<16x32xf32>
    %35 = vector.broadcast %4 : vector<1x32xf32> to vector<16x32xf32>
    %36 = arith.addf %34, %35 : vector<16x32xf32>
    %c0_10 = arith.constant 0 : index
    %c0_11 = arith.constant 0 : index
    %37 = vector.load %arg3[%c0_10, %c0_11] : memref<16x16xf32, #tpu.memory_space<vmem>>, vector<16x16xf32>
    %cst_12 = arith.constant dense<0.000000e+00> : vector<16x32xf32>
    %38 = tpu.matmul %37, %36, %cst_12 {dimension_numbers = #tpu.dot_dimension_numbers<[1], [0], [0], [1], [0, 0, 1, 1], [], []>} : vector<16x16xf32>, vector<16x32xf32>, vector<16x32xf32> -> vector<16x32xf32>
    %cst_13 = arith.constant dense<0.000000e+00> : vector<16x32xf32>
    %39 = tpu.matmul %38, %12, %cst_13 {dimension_numbers = #tpu.dot_dimension_numbers<[1], [0], [0], [1], [0, 0, 1, 1], [], []>} : vector<16x32xf32>, vector<32x32xf32>, vector<16x32xf32> -> vector<16x32xf32>
    %40 = arith.addf %0, %39 : vector<16x32xf32>
    %41 = vector.broadcast %5 : vector<1x32xf32> to vector<16x32xf32>
    %42 = arith.addf %40, %41 : vector<16x32xf32>
    %c0_14 = arith.constant 0 : index
    %c0_15 = arith.constant 0 : index
    %43 = vector.load %arg4[%c0_14, %c0_15] : memref<16x104xf32, #tpu.memory_space<vmem>>, vector<16x104xf32>
    %c0_16 = arith.constant 0 : index
    %c0_17 = arith.constant 0 : index
    %44 = vector.load %arg2[%c0_16, %c0_17] : memref<104x32xf32, #tpu.memory_space<vmem>>, vector<104x32xf32>
    %cst_18 = arith.constant dense<0.000000e+00> : vector<16x32xf32>
    %45 = tpu.matmul %43, %44, %cst_18 {dimension_numbers = #tpu.dot_dimension_numbers<[1], [0], [0], [1], [0, 0, 1, 1], [], []>} : vector<16x104xf32>, vector<104x32xf32>, vector<16x32xf32> -> vector<16x32xf32>
    %cst_19 = arith.constant dense<0.000000e+00> : vector<16x32xf32>
    %46 = tpu.matmul %45, %13, %cst_19 {dimension_numbers = #tpu.dot_dimension_numbers<[1], [0], [0], [1], [0, 0, 1, 1], [], []>} : vector<16x32xf32>, vector<32x32xf32>, vector<16x32xf32> -> vector<16x32xf32>
    %47 = arith.addf %42, %46 : vector<16x32xf32>
    %48 = vector.broadcast %6 : vector<1x32xf32> to vector<16x32xf32>
    %49 = arith.addf %47, %48 : vector<16x32xf32>
    %cst_20 = arith.constant dense<0.000000e+00> : vector<16xf32>
    %50 = vector.multi_reduction <add>, %49, %cst_20 [1] : vector<16x32xf32> to vector<16xf32>
    %51 = vector.shape_cast %50 : vector<16xf32> to vector<16x1xf32>
    %cst_21 = arith.constant 3.200000e+01 : f32
    %52 = vector.broadcast %cst_21 : f32 to vector<16x1xf32>
    %53 = arith.divf %51, %52 : vector<16x1xf32>
    %54 = vector.broadcast %53 : vector<16x1xf32> to vector<16x32xf32>
    %55 = arith.subf %49, %54 : vector<16x32xf32>
    %56 = arith.mulf %55, %55 : vector<16x32xf32>
    %cst_22 = arith.constant dense<0.000000e+00> : vector<16xf32>
    %57 = vector.multi_reduction <add>, %56, %cst_22 [1] : vector<16x32xf32> to vector<16xf32>
    %58 = vector.shape_cast %57 : vector<16xf32> to vector<16x1xf32>
    %cst_23 = arith.constant 3.200000e+01 : f32
    %59 = vector.broadcast %cst_23 : f32 to vector<16x1xf32>
    %60 = arith.divf %58, %59 : vector<16x1xf32>
    %cst_24 = arith.constant 9.99999974E-6 : f32
    %61 = vector.broadcast %cst_24 : f32 to vector<16x1xf32>
    %62 = arith.addf %60, %61 : vector<16x1xf32>
    %63 = math.rsqrt %62 : vector<16x1xf32>
    %64 = vector.broadcast %63 : vector<16x1xf32> to vector<16x32xf32>
    %65 = arith.mulf %55, %64 : vector<16x32xf32>
    %66 = vector.broadcast %7 : vector<1x32xf32> to vector<16x32xf32>
    %67 = arith.mulf %65, %66 : vector<16x32xf32>
    %68 = vector.broadcast %8 : vector<1x32xf32> to vector<16x32xf32>
    %69 = arith.addf %67, %68 : vector<16x32xf32>
    %c0_25 = arith.constant 0 : index
    %c0_26 = arith.constant 0 : index
    %70 = vector.load %arg6[%c0_25, %c0_26] : memref<32x128xf32, #tpu.memory_space<vmem>>, vector<32x128xf32>
    %cst_27 = arith.constant dense<0.000000e+00> : vector<16x128xf32>
    %71 = tpu.matmul %69, %70, %cst_27 {dimension_numbers = #tpu.dot_dimension_numbers<[1], [0], [0], [1], [0, 0, 1, 1], [], []>} : vector<16x32xf32>, vector<32x128xf32>, vector<16x128xf32> -> vector<16x128xf32>
    %c0_28 = arith.constant 0 : index
    %c0_29 = arith.constant 0 : index
    %72 = vector.load %arg9[%c0_28, %c0_29] : memref<1x128xf32, #tpu.memory_space<vmem>>, vector<1x128xf32>
    %73 = vector.broadcast %72 : vector<1x128xf32> to vector<16x128xf32>
    %74 = arith.addf %71, %73 : vector<16x128xf32>
    %cst_30 = arith.constant 5.000000e-01 : f32
    %75 = vector.broadcast %cst_30 : f32 to vector<16x128xf32>
    %76 = arith.mulf %75, %74 : vector<16x128xf32>
    %cst_31 = arith.constant 0.707106769 : f32
    %77 = vector.broadcast %cst_31 : f32 to vector<16x128xf32>
    %78 = arith.mulf %74, %77 : vector<16x128xf32>
    %79 = math.absf %78 : vector<16x128xf32>
    %cst_32 = arith.constant 0.327591091 : f32
    %80 = vector.broadcast %cst_32 : f32 to vector<16x128xf32>
    %81 = arith.mulf %80, %79 : vector<16x128xf32>
    %cst_33 = arith.constant 1.000000e+00 : f32
    %82 = vector.broadcast %cst_33 : f32 to vector<16x128xf32>
    %83 = arith.addf %82, %81 : vector<16x128xf32>
    %cst_34 = arith.constant 1.000000e+00 : f32
    %84 = vector.broadcast %cst_34 : f32 to vector<16x128xf32>
    %85 = arith.divf %84, %83 : vector<16x128xf32>
    %cst_35 = arith.constant 1.06140542 : f32
    %86 = vector.broadcast %cst_35 : f32 to vector<16x128xf32>
    %87 = arith.mulf %86, %85 : vector<16x128xf32>
    %cst_36 = arith.constant 1.45315206 : f32
    %88 = vector.broadcast %cst_36 : f32 to vector<16x128xf32>
    %89 = arith.subf %87, %88 : vector<16x128xf32>
    %90 = arith.mulf %89, %85 : vector<16x128xf32>
    %cst_37 = arith.constant 1.42141378 : f32
    %91 = vector.broadcast %cst_37 : f32 to vector<16x128xf32>
    %92 = arith.addf %90, %91 : vector<16x128xf32>
    %93 = arith.mulf %92, %85 : vector<16x128xf32>
    %cst_38 = arith.constant 0.284496725 : f32
    %94 = vector.broadcast %cst_38 : f32 to vector<16x128xf32>
    %95 = arith.subf %93, %94 : vector<16x128xf32>
    %96 = arith.mulf %95, %85 : vector<16x128xf32>
    %cst_39 = arith.constant 0.254829586 : f32
    %97 = vector.broadcast %cst_39 : f32 to vector<16x128xf32>
    %98 = arith.addf %96, %97 : vector<16x128xf32>
    %99 = arith.mulf %98, %85 : vector<16x128xf32>
    %cst_40 = arith.constant 0.000000e+00 : f32
    %100 = vector.broadcast %cst_40 : f32 to vector<16x128xf32>
    %101 = arith.subf %100, %78 : vector<16x128xf32>
    %102 = arith.mulf %101, %78 : vector<16x128xf32>
    %103 = math.exp %102 : vector<16x128xf32>
    %104 = arith.mulf %99, %103 : vector<16x128xf32>
    %cst_41 = arith.constant 1.000000e+00 : f32
    %105 = vector.broadcast %cst_41 : f32 to vector<16x128xf32>
    %106 = arith.subf %105, %104 : vector<16x128xf32>
    %cst_42 = arith.constant 0.000000e+00 : f32
    %107 = vector.broadcast %cst_42 : f32 to vector<16x128xf32>
    %108 = arith.cmpf oge, %78, %107 : vector<16x128xf32>
    %cst_43 = arith.constant 0.000000e+00 : f32
    %109 = vector.broadcast %cst_43 : f32 to vector<16x128xf32>
    %110 = arith.subf %109, %106 : vector<16x128xf32>
    %111 = arith.select %108, %106, %110 : vector<16x128xi1>, vector<16x128xf32>
    %cst_44 = arith.constant 1.000000e+00 : f32
    %112 = vector.broadcast %cst_44 : f32 to vector<16x128xf32>
    %113 = arith.addf %112, %111 : vector<16x128xf32>
    %114 = arith.mulf %76, %113 : vector<16x128xf32>
    %c0_45 = arith.constant 0 : index
    %c0_46 = arith.constant 0 : index
    %115 = vector.load %arg7[%c0_45, %c0_46] : memref<128x32xf32, #tpu.memory_space<vmem>>, vector<128x32xf32>
    %cst_47 = arith.constant dense<0.000000e+00> : vector<16x32xf32>
    %116 = tpu.matmul %114, %115, %cst_47 {dimension_numbers = #tpu.dot_dimension_numbers<[1], [0], [0], [1], [0, 0, 1, 1], [], []>} : vector<16x128xf32>, vector<128x32xf32>, vector<16x32xf32> -> vector<16x32xf32>
    %117 = arith.addf %49, %116 : vector<16x32xf32>
    %118 = vector.broadcast %9 : vector<1x32xf32> to vector<16x32xf32>
    %119 = arith.addf %117, %118 : vector<16x32xf32>
    %c0_48 = arith.constant 0 : index
    %c0_49 = arith.constant 0 : index
    %120 = vector.load %arg10[%c0_48, %c0_49] : memref<16x32xf32, #tpu.memory_space<vmem>>, vector<16x32xf32>
    tpu.vector_store %arg10[%c0_48, %c0_49], %119 {strides = array<i32>} : memref<16x32xf32, #tpu.memory_space<vmem>>, vector<16x32xf32>,
    return
  }
  func.func @transform_0(%arg0: i32) -> (i32, i32) {
    %c0_i32 = arith.constant 0 : i32
    %c0_i32_0 = arith.constant 0 : i32
    %c0_i32_1 = arith.constant 0 : i32
    return %c0_i32, %c0_i32_0 : i32, i32
  }
  func.func @transform_1(%arg0: i32) -> (i32, i32) {
    %c0_i32 = arith.constant 0 : i32
    %c0_i32_0 = arith.constant 0 : i32
    %c0_i32_1 = arith.constant 0 : i32
    return %c0_i32, %c0_i32_0 : i32, i32
  }
  func.func @transform_2(%arg0: i32) -> (i32, i32) {
    %c0_i32 = arith.constant 0 : i32
    %c0_i32_0 = arith.constant 0 : i32
    %c0_i32_1 = arith.constant 0 : i32
    return %c0_i32, %c0_i32_0 : i32, i32
  }
  func.func @transform_3(%arg0: i32) -> (i32, i32) {
    %c0_i32 = arith.constant 0 : i32
    %c0_i32_0 = arith.constant 0 : i32
    %c0_i32_1 = arith.constant 0 : i32
    return %c0_i32, %c0_i32_0 : i32, i32
  }
  func.func @transform_4(%arg0: i32) -> (i32, i32) {
    %c0_i32 = arith.constant 0 : i32
    %c0_i32_0 = arith.constant 0 : i32
    %c0_i32_1 = arith.constant 0 : i32
    return %c0_i32, %c0_i32_0 : i32, i32
  }
  func.func @transform_5(%arg0: i32) -> (i32, i32) {
    %c0_i32 = arith.constant 0 : i32
    %c0_i32_0 = arith.constant 0 : i32
    %c0_i32_1 = arith.constant 0 : i32
    return %c0_i32, %c0_i32_0 : i32, i32
  }
  func.func @transform_6(%arg0: i32) -> (i32, i32) {
    %c0_i32 = arith.constant 0 : i32
    %c0_i32_0 = arith.constant 0 : i32
    %c0_i32_1 = arith.constant 0 : i32
    return %c0_i32, %c0_i32_0 : i32, i32
  }
  func.func @transform_7(%arg0: i32) -> (i32, i32) {
    %c0_i32 = arith.constant 0 : i32
    %c0_i32_0 = arith.constant 0 : i32
    %c0_i32_1 = arith.constant 0 : i32
    return %c0_i32, %c0_i32_0 : i32, i32
  }
  func.func @transform_8(%arg0: i32) -> (i32, i32) {
    %c0_i32 = arith.constant 0 : i32
    %c0_i32_0 = arith.constant 0 : i32
    %c0_i32_1 = arith.constant 0 : i32
    return %c0_i32, %c0_i32_0 : i32, i32
  }
  func.func @transform_9(%arg0: i32) -> (i32, i32) {
    %c0_i32 = arith.constant 0 : i32
    %c0_i32_0 = arith.constant 0 : i32
    %c0_i32_1 = arith.constant 0 : i32
    return %c0_i32, %c0_i32_0 : i32, i32
  }
}

</mosaic_0001>

<llo_original>
// kernel: tpu_custom_call.1
$region0: #{tpu_custom_call.1}
  #allocation0 [shape = 'u32[]', space=smem, size = 0x4, offset = 0x4, fixed_abs, tag = 'smem constant byte address 0x4 - core index']
  #allocation1 [shape = 'u32[144,128]{1,0:T(1,128)}', space=vmem, size = 0x12000, scoped, tag = 'internal scratch']
  %s0 = inlined_call_operand.vmem [shape: f32[16,32], index: 0, kind: input, shape index: {}]
  %s1 = inlined_call_operand.vmem [shape: f32[104,32], index: 1, kind: input, shape index: {}]
  %s2 = inlined_call_operand.vmem [shape: f32[16,16], index: 2, kind: input, shape index: {}]
  %s3 = inlined_call_operand.vmem [shape: f32[16,104], index: 3, kind: input, shape index: {}]
  %s4 = inlined_call_operand.vmem [shape: f32[96,32], index: 4, kind: input, shape index: {}]
  %s5 = inlined_call_operand.vmem [shape: f32[32,128], index: 5, kind: input, shape index: {}]
  %s6 = inlined_call_operand.vmem [shape: f32[128,32], index: 6, kind: input, shape index: {}]
  %s7 = inlined_call_operand.vmem [shape: f32[8,32], index: 7, kind: input, shape index: {}]
  %s8 = inlined_call_operand.vmem [shape: f32[1,128], index: 8, kind: input, shape index: {}]
  %s9 = inlined_call_operand.hbm [shape: f32[16,32], index: 9, kind: output, shape index: {}]
  %s10 = sld [smem:[#allocation0]]
  $region46: #{tpu_custom_call.1} parent=0
    _
  %s12 = ssub.s32 1, %s10
  %s13 = scalar_select 0, %s12, %s10
  $region1: #{tpu_custom_call.1} parent=0
    #allocation2 [shape = 'u8[8192]{0}', space=vmem, size = 0x2000, scoped, tag = 'output window, operand 0, single buffered']
    #allocation3 [shape = 's32[1]{0}', space=sflag, size = 0x4, scoped, tag = 'scoped memory for tpu_custom_call.1']
    %14 = vsyncpa [#allocation3], 0
    // Predicated region
    $region2: #{tpu_custom_call.1} parent=1 // pred_check
      _
    $region3: #{tpu_custom_call.1} parent=1 // pred_check_branch
      %16 = sbr.rel (0) target = $region5
    $region4: #{tpu_custom_call.1} parent=1 // pred_region
      _
    $region5: #{tpu_custom_call.1} parent=1 // pred_fallthru
      _
    // Predicated region
    $region6: #{tpu_custom_call.1} parent=1 // pred_check
      _
    $region7: #{tpu_custom_call.1} parent=1 // pred_check_branch
      %18 = sbr.rel (0) target = $region9
    $region8: #{tpu_custom_call.1} parent=1 // pred_region
      _
    $region9: #{tpu_custom_call.1} parent=1 // pred_fallthru
      _
    // Predicated region
    $region10: #{tpu_custom_call.1} parent=1 // pred_check
      _
    $region11: #{tpu_custom_call.1} parent=1 // pred_check_branch
      %20 = sbr.rel (0) target = $region13
    $region12: #{tpu_custom_call.1} parent=1 // pred_region
      _
    $region13: #{tpu_custom_call.1} parent=1 // pred_fallthru
      _
    // Predicated region
    $region14: #{tpu_custom_call.1} parent=1 // pred_check
      _
    $region15: #{tpu_custom_call.1} parent=1 // pred_check_branch
      %22 = sbr.rel (0) target = $region17
    $region16: #{tpu_custom_call.1} parent=1 // pred_region
      _
    $region17: #{tpu_custom_call.1} parent=1 // pred_fallthru
      _
    // Predicated region
    $region18: #{tpu_custom_call.1} parent=1 // pred_check
      _
    $region19: #{tpu_custom_call.1} parent=1 // pred_check_branch
      %24 = sbr.rel (0) target = $region21
    $region20: #{tpu_custom_call.1} parent=1 // pred_region
      _
    $region21: #{tpu_custom_call.1} parent=1 // pred_fallthru
      _
    // Predicated region
    $region22: #{tpu_custom_call.1} parent=1 // pred_check
      _
    $region23: #{tpu_custom_call.1} parent=1 // pred_check_branch
      %26 = sbr.rel (0) target = $region25
    $region24: #{tpu_custom_call.1} parent=1 // pred_region
      _
    $region25: #{tpu_custom_call.1} parent=1 // pred_fallthru
      _
    // Predicated region
    $region26: #{tpu_custom_call.1} parent=1 // pred_check
      _
    $region27: #{tpu_custom_call.1} parent=1 // pred_check_branch
      %28 = sbr.rel (0) target = $region29
    $region28: #{tpu_custom_call.1} parent=1 // pred_region
      _
    $region29: #{tpu_custom_call.1} parent=1 // pred_fallthru
      _
    // Predicated region
    $region30: #{tpu_custom_call.1} parent=1 // pred_check
      _
    $region31: #{tpu_custom_call.1} parent=1 // pred_check_branch
      %30 = sbr.rel (0) target = $region33
    $region32: #{tpu_custom_call.1} parent=1 // pred_region
      _
    $region33: #{tpu_custom_call.1} parent=1 // pred_fallthru
      _
    // Predicated region
    $region34: #{tpu_custom_call.1} parent=1 // pred_check
      _
    $region35: #{tpu_custom_call.1} parent=1 // pred_check_branch
      %32 = sbr.rel (0) target = $region37
    $region36: #{tpu_custom_call.1} parent=1 // pred_region
      _
    $region37: #{tpu_custom_call.1} parent=1 // pred_fallthru
      _
    %v33 = vld [vmem:[%s0] sm:$0xff]
    %v34 = vld [vmem:[%s0 + $0x8] sm:$0xff]
    %v35 = vld [vmem:[%s7] sm:$0xff]
    %v36 = vld [vmem:[%s4] sm:$0xff]
    %v37 = vld [vmem:[%s4 + $0x8] sm:$0xff]
    %v38 = vld [vmem:[%s4 + $0x10] sm:$0xff]
    %v39 = vld [vmem:[%s4 + $0x18] sm:$0xff]
    %v40 = vld [vmem:[%s4 + $0x20] sm:$0xff]
    %v41 = vld [vmem:[%s4 + $0x28] sm:$0xff]
    %v42 = vld [vmem:[%s4 + $0x30] sm:$0xff]
    %v43 = vld [vmem:[%s4 + $0x38] sm:$0xff]
    %v44 = vld [vmem:[%s4 + $0x40] sm:$0xff]
    %v45 = vld [vmem:[%s4 + $0x48] sm:$0xff]
    %v46 = vld [vmem:[%s4 + $0x50] sm:$0xff]
    %v47 = vld [vmem:[%s4 + $0x58] sm:$0xff]
    %vm48 = vcmask 261120
    %v49 = vsel %vm48, %v33, 0.0
    %50 = vadd.xlane.f32.xlu0 %v49
    %v51 = vpop.xlane.xlu0 %50
    %v52 = vsel %vm48, %v34, 0.0
    %53 = vadd.xlane.f32.xlu0 %v52
    %v54 = vpop.xlane.xlu0 %53
    %v55 = vrcp.pop 32.0
    %v56 = vmul.f32 %v51, %v55
    %v57 = vmul.f32 %v54, %v55
    %v58 = vsub.f32 %v33, %v56
    %v59 = vsub.f32 %v34, %v57
    %v60 = vmul.f32 %v58, %v58
    %v61 = vmul.f32 %v59, %v59
    %v62 = vsel %vm48, %v60, 0.0
    %63 = vadd.xlane.f32.xlu0 %v62
    %v64 = vpop.xlane.xlu0 %63
    %v65 = vsel %vm48, %v61, 0.0
    %66 = vadd.xlane.f32.xlu0 %v65
    %v67 = vpop.xlane.xlu0 %66
    %v68 = vmul.f32 %v64, %v55
    %v69 = vmul.f32 %v67, %v55
    %v70 = vadd.f32 %v68, 1e-05
    %v71 = vadd.f32 %v69, 1e-05
    %v72 = vrsqrt.pop %v70
    %v73 = vrsqrt.pop %v71
    %v74 = vmul.f32 %v58, %v72
    %v75 = vmul.f32 %v59, %v73
    %v76 = vlaneseq
    %v77 = vshrl.u32 %v76, 7
    %v78 = vsub.s32 0, %v77
    %v79 = vrot.slane %v35, %v78
    %v80 = vmul.f32 %v74, %v79
    %v81 = vmul.f32 %v75, %v79
    %v82 = vlaneseq
    %v83 = vshrl.u32 %v82, 7
    %v84 = vsub.s32 1, %v83
    %v85 = vrot.slane %v35, %v84
    %v86 = vadd.f32 %v80, %v85
    %v87 = vadd.f32 %v81, %v85
    %v88 = vlaneseq
    %v89 = vshrl.u32 %v88, 7
    %v90 = vsub.s32 2, %v89
    %v91 = vrot.slane %v35, %v90
    %v93 = vsel %vm48, %v86, 0
    %v96 = vsel %vm48, %v87, 0
    %98 = vmatprep.subr.mxu0 0.0
    %99 = vmatpush1.msra.mxu0 %v36
    %100 = vmatprep.subr.mxu0 0.0
    %101 = vmatpush1.msra.mxu0 %v37
    %102 = vmatprep.subr.mxu0 0.0
    %103 = vmatpush1.msra.mxu0 %v38
    %104 = vmatprep.subr.mxu0 0.0
    %105 = vmatpush1.msra.mxu0 %v39
    %106 = vmatprep.subr.mxu0 0.0
    %107 = vmatpush1.msra.mxu0 0.0
    %108 = vmatprep.subr.mxu0 0.0
    %109 = vmatpush1.msra.mxu0 0.0
    %110 = vmatprep.subr.mxu0 0.0
    %111 = vmatpush1.msra.mxu0 0.0
    %112 = vmatprep.subr.mxu0 0.0
    %113 = vmatpush1.msra.mxu0 0.0
    %114 = vmatprep.subr.mxu0 0.0
    %115 = vmatpush1.msra.mxu0 0.0
    %116 = vmatprep.subr.mxu0 0.0
    %117 = vmatpush1.msra.mxu0 0.0
    %118 = vmatprep.subr.mxu0 0.0
    %119 = vmatpush1.msra.mxu0 0.0
    %120 = vmatprep.subr.mxu0 0.0
    %121 = vmatpush1.msra.mxu0 0.0
    %122 = vmatprep.subr.mxu0 0.0
    %123 = vmatpush1.msra.mxu0 0.0
    %124 = vmatprep.subr.mxu0 0.0
    %125 = vmatpush1.msra.mxu0 0.0
    %126 = vmatprep.subr.mxu0 0.0
    %127 = vmatpush1.msra.mxu0 0.0
    %128 = vmatprep.subr.mxu0 0.0
    %129 = vmatpush1.msra.mxu0 0.0
    %130 = vmatprep.subr.mxu0 0.0
    %131 = vmatpush1.msra.mxu0 0.0
    %132 = vmatprep.subr.mxu0 0.0
    %133 = vmatpush1.msra.mxu0 0.0
    %134 = vmatprep.subr.mxu0 0.0
    %135 = vmatpush1.msra.mxu0 0.0
    %136 = vmatprep.subr.mxu0 0.0
    %137 = vmatpush1.msra.mxu0 0.0
    %138 = vmatprep.subr.mxu0 0.0
    %139 = vmatpush1.msra.mxu0 0.0
    %140 = vmatprep.subr.mxu0 0.0
    %141 = vmatpush1.msra.mxu0 0.0
    %142 = vmatprep.subr.mxu0 0.0
    %143 = vmatpush1.msra.mxu0 0.0
    %144 = vmatprep.subr.mxu0 0.0
    %145 = vmatpush1.msra.mxu0 0.0
    %146 = vmatprep.subr.mxu0 0.0
    %147 = vmatpush1.msra.mxu0 0.0
    %148 = vmatprep.subr.mxu0 0.0
    %149 = vmatpush1.msra.mxu0 0.0
    %150 = vmatprep.subr.mxu0 0.0
    %151 = vmatpush1.msra.mxu0 0.0
    %152 = vmatprep.subr.mxu0 0.0
    %153 = vmatpush1.msra.mxu0 0.0
    %154 = vmatprep.subr.mxu0 0.0
    %155 = vmatpush1.msra.mxu0 0.0
    %156 = vmatprep.subr.mxu0 0.0
    %157 = vmatpush1.msra.mxu0 0.0
    %158 = vmatprep.subr.mxu0 0.0
    %159 = vmatpush1.msra.mxu0 0.0
    %160 = vmatprep.subr.mxu0 0.0
    %161 = vmatpush1.msra.mxu0 0.0
    %162 = vmatprep.mubr.f32.mxu0 0.0
    %163 = vmatmul.mubr.f32.gmra.mrb[0].mxu0 %v93
    %v164 = vpop.f32.mrb[0].mxu0
    %v165 = vadd.f32 %v91, %v164
    %v166 = vpop.f32.mrb[0].mxu0
    %167 = vmatprep.mubr.f32.mxu0 0.0
    %168 = vmatmul.mubr.f32.gmra.mrb[0].mxu0 %v96
    %v169 = vpop.f32.mrb[0].mxu0
    %v170 = vadd.f32 %v91, %v169
    %v171 = vpop.f32.mrb[0].mxu0
    %172 = vdwg.mxu0
    %v173 = vld [vmem:[%s2] sm:$0xff]
    %v174 = vld [vmem:[%s2 + $0x8] sm:$0xff]
    %vm175 = vcmask 130048
    %v177 = vsel %vm175, %v173, 0
    %v180 = vsel %vm175, %v174, 0
    %182 = vmatprep.subr.mxu0 0.0
    %183 = vmatpush1.msra.mxu0 %v165
    %184 = vmatprep.subr.mxu0 0.0
    %185 = vmatpush1.msra.mxu0 %v170
    %186 = vmatprep.subr.mxu0 0.0
    %187 = vmatpush1.msra.mxu0 0.0
    %188 = vmatprep.subr.mxu0 0.0
    %189 = vmatpush1.msra.mxu0 0.0
    %190 = vmatprep.subr.mxu0 0.0
    %191 = vmatpush1.msra.mxu0 0.0
    %192 = vmatprep.subr.mxu0 0.0
    %193 = vmatpush1.msra.mxu0 0.0
    %194 = vmatprep.subr.mxu0 0.0
    %195 = vmatpush1.msra.mxu0 0.0
    %196 = vmatprep.subr.mxu0 0.0
    %197 = vmatpush1.msra.mxu0 0.0
    %198 = vmatprep.subr.mxu0 0.0
    %199 = vmatpush1.msra.mxu0 0.0
    %200 = vmatprep.subr.mxu0 0.0
    %201 = vmatpush1.msra.mxu0 0.0
    %202 = vmatprep.subr.mxu0 0.0
    %203 = vmatpush1.msra.mxu0 0.0
    %204 = vmatprep.subr.mxu0 0.0
    %205 = vmatpush1.msra.mxu0 0.0
    %206 = vmatprep.subr.mxu0 0.0
    %207 = vmatpush1.msra.mxu0 0.0
    %208 = vmatprep.subr.mxu0 0.0
    %209 = vmatpush1.msra.mxu0 0.0
    %210 = vmatprep.subr.mxu0 0.0
    %211 = vmatpush1.msra.mxu0 0.0
    %212 = vmatprep.subr.mxu0 0.0
    %213 = vmatpush1.msra.mxu0 0.0
    %214 = vmatprep.subr.mxu0 0.0
    %215 = vmatpush1.msra.mxu0 0.0
    %216 = vmatprep.subr.mxu0 0.0
    %217 = vmatpush1.msra.mxu0 0.0
    %218 = vmatprep.subr.mxu0 0.0
    %219 = vmatpush1.msra.mxu0 0.0
    %220 = vmatprep.subr.mxu0 0.0
    %221 = vmatpush1.msra.mxu0 0.0
    %222 = vmatprep.subr.mxu0 0.0
    %223 = vmatpush1.msra.mxu0 0.0
    %224 = vmatprep.subr.mxu0 0.0
    %225 = vmatpush1.msra.mxu0 0.0
    %226 = vmatprep.subr.mxu0 0.0
    %227 = vmatpush1.msra.mxu0 0.0
    %228 = vmatprep.subr.mxu0 0.0
    %229 = vmatpush1.msra.mxu0 0.0
    %230 = vmatprep.subr.mxu0 0.0
    %231 = vmatpush1.msra.mxu0 0.0
    %232 = vmatprep.subr.mxu0 0.0
    %233 = vmatpush1.msra.mxu0 0.0
    %234 = vmatprep.subr.mxu0 0.0
    %235 = vmatpush1.msra.mxu0 0.0
    %236 = vmatprep.subr.mxu0 0.0
    %237 = vmatpush1.msra.mxu0 0.0
    %238 = vmatprep.subr.mxu0 0.0
    %239 = vmatpush1.msra.mxu0 0.0
    %240 = vmatprep.subr.mxu0 0.0
    %241 = vmatpush1.msra.mxu0 0.0
    %242 = vmatprep.subr.mxu0 0.0
    %243 = vmatpush1.msra.mxu0 0.0
    %244 = vmatprep.subr.mxu0 0.0
    %245 = vmatpush1.msra.mxu0 0.0
    %246 = vmatprep.mubr.f32.mxu0 0.0
    %247 = vmatmul.mubr.f32.gmra.mrb[0].mxu0 %v177
    %v248 = vpop.f32.mrb[0].mxu0
    %v249 = vadd.f32 0.0, %v248
    %v250 = vpop.f32.mrb[0].mxu0
    %251 = vmatprep.mubr.f32.mxu0 0.0
    %252 = vmatmul.mubr.f32.gmra.mrb[0].mxu0 %v180
    %v253 = vpop.f32.mrb[0].mxu0
    %v254 = vadd.f32 0.0, %v253
    %v255 = vpop.f32.mrb[0].mxu0
    %256 = vdwg.mxu0
    %v258 = vsel %vm48, %v249, 0
    %v261 = vsel %vm48, %v254, 0
    %263 = vmatprep.subr.mxu0 0.0
    %264 = vmatpush1.msra.mxu0 %v40
    %265 = vmatprep.subr.mxu0 0.0
    %266 = vmatpush1.msra.mxu0 %v41
    %267 = vmatprep.subr.mxu0 0.0
    %268 = vmatpush1.msra.mxu0 %v42
    %269 = vmatprep.subr.mxu0 0.0
    %270 = vmatpush1.msra.mxu0 %v43
    %271 = vmatprep.subr.mxu0 0.0
    %272 = vmatpush1.msra.mxu0 0.0
    %273 = vmatprep.subr.mxu0 0.0
    %274 = vmatpush1.msra.mxu0 0.0
    %275 = vmatprep.subr.mxu0 0.0
    %276 = vmatpush1.msra.mxu0 0.0
    %277 = vmatprep.subr.mxu0 0.0
    %278 = vmatpush1.msra.mxu0 0.0
    %279 = vmatprep.subr.mxu0 0.0
    %280 = vmatpush1.msra.mxu0 0.0
    %281 = vmatprep.subr.mxu0 0.0
    %282 = vmatpush1.msra.mxu0 0.0
    %283 = vmatprep.subr.mxu0 0.0
    %284 = vmatpush1.msra.mxu0 0.0
    %285 = vmatprep.subr.mxu0 0.0
    %286 = vmatpush1.msra.mxu0 0.0
    %287 = vmatprep.subr.mxu0 0.0
    %288 = vmatpush1.msra.mxu0 0.0
    %289 = vmatprep.subr.mxu0 0.0
    %290 = vmatpush1.msra.mxu0 0.0
    %291 = vmatprep.subr.mxu0 0.0
    %292 = vmatpush1.msra.mxu0 0.0
    %293 = vmatprep.subr.mxu0 0.0
    %294 = vmatpush1.msra.mxu0 0.0
    %295 = vmatprep.subr.mxu0 0.0
    %296 = vmatpush1.msra.mxu0 0.0
    %297 = vmatprep.subr.mxu0 0.0
    %298 = vmatpush1.msra.mxu0 0.0
    %299 = vmatprep.subr.mxu0 0.0
    %300 = vmatpush1.msra.mxu0 0.0
    %301 = vmatprep.subr.mxu0 0.0
    %302 = vmatpush1.msra.mxu0 0.0
    %303 = vmatprep.subr.mxu0 0.0
    %304 = vmatpush1.msra.mxu0 0.0
    %305 = vmatprep.subr.mxu0 0.0
    %306 = vmatpush1.msra.mxu0 0.0
    %307 = vmatprep.subr.mxu0 0.0
    %308 = vmatpush1.msra.mxu0 0.0
    %309 = vmatprep.subr.mxu0 0.0
    %310 = vmatpush1.msra.mxu0 0.0
    %311 = vmatprep.subr.mxu0 0.0
    %312 = vmatpush1.msra.mxu0 0.0
    %313 = vmatprep.subr.mxu0 0.0
    %314 = vmatpush1.msra.mxu0 0.0
    %315 = vmatprep.subr.mxu0 0.0
    %316 = vmatpush1.msra.mxu0 0.0
    %317 = vmatprep.subr.mxu0 0.0
    %318 = vmatpush1.msra.mxu0 0.0
    %319 = vmatprep.subr.mxu0 0.0
    %320 = vmatpush1.msra.mxu0 0.0
    %321 = vmatprep.subr.mxu0 0.0
    %322 = vmatpush1.msra.mxu0 0.0
    %323 = vmatprep.subr.mxu0 0.0
    %324 = vmatpush1.msra.mxu0 0.0
    %325 = vmatprep.subr.mxu0 0.0
    %326 = vmatpush1.msra.mxu0 0.0
    %327 = vmatprep.mubr.f32.mxu0 0.0
    %328 = vmatmul.mubr.f32.gmra.mrb[0].mxu0 %v258
    %v329 = vpop.f32.mrb[0].mxu0
    %v330 = vadd.f32 0.0, %v329
    %v331 = vpop.f32.mrb[0].mxu0
    %332 = vmatprep.mubr.f32.mxu0 0.0
    %333 = vmatmul.mubr.f32.gmra.mrb[0].mxu0 %v261
    %v334 = vpop.f32.mrb[0].mxu0
    %v335 = vadd.f32 0.0, %v334
    %v336 = vpop.f32.mrb[0].mxu0
    %337 = vdwg.mxu0
    %v338 = vadd.f32 %v33, %v330
    %v339 = vadd.f32 %v34, %v335
    %v340 = vlaneseq
    %v341 = vshrl.u32 %v340, 7
    %v342 = vsub.s32 3, %v341
    %v343 = vrot.slane %v35, %v342
    %v344 = vadd.f32 %v338, %v343
    %v345 = vadd.f32 %v339, %v343
    %v346 = vld [vmem:[%s3] sm:$0xff]
    %v347 = vld [vmem:[%s3 + $0x8] sm:$0xff]
    %v348 = vld [vmem:[%s1] sm:$0xff]
    %v349 = vld [vmem:[%s1 + $0x8] sm:$0xff]
    %v350 = vld [vmem:[%s1 + $0x10] sm:$0xff]
    %v351 = vld [vmem:[%s1 + $0x18] sm:$0xff]
    %v352 = vld [vmem:[%s1 + $0x20] sm:$0xff]
    %v353 = vld [vmem:[%s1 + $0x28] sm:$0xff]
    %v354 = vld [vmem:[%s1 + $0x30] sm:$0xff]
    %v355 = vld [vmem:[%s1 + $0x38] sm:$0xff]
    %v356 = vld [vmem:[%s1 + $0x40] sm:$0xff]
    %v357 = vld [vmem:[%s1 + $0x48] sm:$0xff]
    %v358 = vld [vmem:[%s1 + $0x50] sm:$0xff]
    %v359 = vld [vmem:[%s1 + $0x58] sm:$0xff]
    %v360 = vld [vmem:[%s1 + $0x60] sm:$0xff]
    %vm361 = vcmask 850944
    %v363 = vsel %vm361, %v346, 0
    %v366 = vsel %vm361, %v347, 0
    %368 = vmatprep.subr.mxu0 0.0
    %369 = vmatpush1.msra.mxu0 %v348
    %370 = vmatprep.subr.mxu0 0.0
    %371 = vmatpush1.msra.mxu0 %v349
    %372 = vmatprep.subr.mxu0 0.0
    %373 = vmatpush1.msra.mxu0 %v350
    %374 = vmatprep.subr.mxu0 0.0
    %375 = vmatpush1.msra.mxu0 %v351
    %376 = vmatprep.subr.mxu0 0.0
    %377 = vmatpush1.msra.mxu0 %v352
    %378 = vmatprep.subr.mxu0 0.0
    %379 = vmatpush1.msra.mxu0 %v353
    %380 = vmatprep.subr.mxu0 0.0
    %381 = vmatpush1.msra.mxu0 %v354
    %382 = vmatprep.subr.mxu0 0.0
    %383 = vmatpush1.msra.mxu0 %v355
    %384 = vmatprep.subr.mxu0 0.0
    %385 = vmatpush1.msra.mxu0 %v356
    %386 = vmatprep.subr.mxu0 0.0
    %387 = vmatpush1.msra.mxu0 %v357
    %388 = vmatprep.subr.mxu0 0.0
    %389 = vmatpush1.msra.mxu0 %v358
    %390 = vmatprep.subr.mxu0 0.0
    %391 = vmatpush1.msra.mxu0 %v359
    %392 = vmatprep.subr.mxu0 0.0
    %393 = vmatpush1.msra.mxu0 %v360
    %394 = vmatprep.subr.mxu0 0.0
    %395 = vmatpush1.msra.mxu0 0.0
    %396 = vmatprep.subr.mxu0 0.0
    %397 = vmatpush1.msra.mxu0 0.0
    %398 = vmatprep.subr.mxu0 0.0
    %399 = vmatpush1.msra.mxu0 0.0
    %400 = vmatprep.subr.mxu0 0.0
    %401 = vmatpush1.msra.mxu0 0.0
    %402 = vmatprep.subr.mxu0 0.0
    %403 = vmatpush1.msra.mxu0 0.0
    %404 = vmatprep.subr.mxu0 0.0
    %405 = vmatpush1.msra.mxu0 0.0
    %406 = vmatprep.subr.mxu0 0.0
    %407 = vmatpush1.msra.mxu0 0.0
    %408 = vmatprep.subr.mxu0 0.0
    %409 = vmatpush1.msra.mxu0 0.0
    %410 = vmatprep.subr.mxu0 0.0
    %411 = vmatpush1.msra.mxu0 0.0
    %412 = vmatprep.subr.mxu0 0.0
    %413 = vmatpush1.msra.mxu0 0.0
    %414 = vmatprep.subr.mxu0 0.0
    %415 = vmatpush1.msra.mxu0 0.0
    %416 = vmatprep.subr.mxu0 0.0
    %417 = vmatpush1.msra.mxu0 0.0
    %418 = vmatprep.subr.mxu0 0.0
    %419 = vmatpush1.msra.mxu0 0.0
    %420 = vmatprep.subr.mxu0 0.0
    %421 = vmatpush1.msra.mxu0 0.0
    %422 = vmatprep.subr.mxu0 0.0
    %423 = vmatpush1.msra.mxu0 0.0
    %424 = vmatprep.subr.mxu0 0.0
    %425 = vmatpush1.msra.mxu0 0.0
    %426 = vmatprep.subr.mxu0 0.0
    %427 = vmatpush1.msra.mxu0 0.0
    %428 = vmatprep.subr.mxu0 0.0
    %429 = vmatpush1.msra.mxu0 0.0
    %430 = vmatprep.subr.mxu0 0.0
    %431 = vmatpush1.msra.mxu0 0.0
    %432 = vmatprep.mubr.f32.mxu0 0.0
    %433 = vmatmul.mubr.f32.gmra.mrb[0].mxu0 %v363
    %v434 = vpop.f32.mrb[0].mxu0
    %v435 = vadd.f32 0.0, %v434
    %v436 = vpop.f32.mrb[0].mxu0
    %437 = vmatprep.mubr.f32.mxu0 0.0
    %438 = vmatmul.mubr.f32.gmra.mrb[0].mxu0 %v366
    %v439 = vpop.f32.mrb[0].mxu0
    %v440 = vadd.f32 0.0, %v439
    %v441 = vpop.f32.mrb[0].mxu0
    %442 = vdwg.mxu0
    %v444 = vsel %vm48, %v435, 0
    %v447 = vsel %vm48, %v440, 0
    %449 = vmatprep.subr.mxu0 0.0
    %450 = vmatpush1.msra.mxu0 %v44
    %451 = vmatprep.subr.mxu0 0.0
    %452 = vmatpush1.msra.mxu0 %v45
    %453 = vmatprep.subr.mxu0 0.0
    %454 = vmatpush1.msra.mxu0 %v46
    %455 = vmatprep.subr.mxu0 0.0
    %456 = vmatpush1.msra.mxu0 %v47
    %457 = vmatprep.subr.mxu0 0.0
    %458 = vmatpush1.msra.mxu0 0.0
    %459 = vmatprep.subr.mxu0 0.0
    %460 = vmatpush1.msra.mxu0 0.0
    %461 = vmatprep.subr.mxu0 0.0
    %462 = vmatpush1.msra.mxu0 0.0
    %463 = vmatprep.subr.mxu0 0.0
    %464 = vmatpush1.msra.mxu0 0.0
    %465 = vmatprep.subr.mxu0 0.0
    %466 = vmatpush1.msra.mxu0 0.0
    %467 = vmatprep.subr.mxu0 0.0
    %468 = vmatpush1.msra.mxu0 0.0
    %469 = vmatprep.subr.mxu0 0.0
    %470 = vmatpush1.msra.mxu0 0.0
    %471 = vmatprep.subr.mxu0 0.0
    %472 = vmatpush1.msra.mxu0 0.0
    %473 = vmatprep.subr.mxu0 0.0
    %474 = vmatpush1.msra.mxu0 0.0
    %475 = vmatprep.subr.mxu0 0.0
    %476 = vmatpush1.msra.mxu0 0.0
    %477 = vmatprep.subr.mxu0 0.0
    %478 = vmatpush1.msra.mxu0 0.0
    %479 = vmatprep.subr.mxu0 0.0
    %480 = vmatpush1.msra.mxu0 0.0
    %481 = vmatprep.subr.mxu0 0.0
    %482 = vmatpush1.msra.mxu0 0.0
    %483 = vmatprep.subr.mxu0 0.0
    %484 = vmatpush1.msra.mxu0 0.0
    %485 = vmatprep.subr.mxu0 0.0
    %486 = vmatpush1.msra.mxu0 0.0
    %487 = vmatprep.subr.mxu0 0.0
    %488 = vmatpush1.msra.mxu0 0.0
    %489 = vmatprep.subr.mxu0 0.0
    %490 = vmatpush1.msra.mxu0 0.0
    %491 = vmatprep.subr.mxu0 0.0
    %492 = vmatpush1.msra.mxu0 0.0
    %493 = vmatprep.subr.mxu0 0.0
    %494 = vmatpush1.msra.mxu0 0.0
    %495 = vmatprep.subr.mxu0 0.0
    %496 = vmatpush1.msra.mxu0 0.0
    %497 = vmatprep.subr.mxu0 0.0
    %498 = vmatpush1.msra.mxu0 0.0
    %499 = vmatprep.subr.mxu0 0.0
    %500 = vmatpush1.msra.mxu0 0.0
    %501 = vmatprep.subr.mxu0 0.0
    %502 = vmatpush1.msra.mxu0 0.0
    %503 = vmatprep.subr.mxu0 0.0
    %504 = vmatpush1.msra.mxu0 0.0
    %505 = vmatprep.subr.mxu0 0.0
    %506 = vmatpush1.msra.mxu0 0.0
    %507 = vmatprep.subr.mxu0 0.0
    %508 = vmatpush1.msra.mxu0 0.0
    %509 = vmatprep.subr.mxu0 0.0
    %510 = vmatpush1.msra.mxu0 0.0
    %511 = vmatprep.subr.mxu0 0.0
    %512 = vmatpush1.msra.mxu0 0.0
    %513 = vmatprep.mubr.f32.mxu0 0.0
    %514 = vmatmul.mubr.f32.gmra.mrb[0].mxu0 %v444
    %v515 = vpop.f32.mrb[0].mxu0
    %v516 = vadd.f32 0.0, %v515
    %v517 = vpop.f32.mrb[0].mxu0
    %518 = vmatprep.mubr.f32.mxu0 0.0
    %519 = vmatmul.mubr.f32.gmra.mrb[0].mxu0 %v447
    %v520 = vpop.f32.mrb[0].mxu0
    %v521 = vadd.f32 0.0, %v520
    %v522 = vpop.f32.mrb[0].mxu0
    %523 = vdwg.mxu0
    %v524 = vadd.f32 %v344, %v516
    %v525 = vadd.f32 %v345, %v521
    %v526 = vlaneseq
    %v527 = vshrl.u32 %v526, 7
    %v528 = vsub.s32 4, %v527
    %v529 = vrot.slane %v35, %v528
    %v530 = vadd.f32 %v524, %v529
    %v531 = vadd.f32 %v525, %v529
    %v532 = vsel %vm48, %v530, 0.0
    %533 = vadd.xlane.f32.xlu0 %v532
    %v534 = vpop.xlane.xlu0 %533
    %v535 = vsel %vm48, %v531, 0.0
    %536 = vadd.xlane.f32.xlu0 %v535
    %v537 = vpop.xlane.xlu0 %536
    %v538 = vmul.f32 %v534, %v55
    %v539 = vmul.f32 %v537, %v55
    %v540 = vsub.f32 %v530, %v538
    %v541 = vsub.f32 %v531, %v539
    %v542 = vmul.f32 %v540, %v540
    %v543 = vmul.f32 %v541, %v541
    %v544 = vsel %vm48, %v542, 0.0
    %545 = vadd.xlane.f32.xlu0 %v544
    %v546 = vpop.xlane.xlu0 %545
    %v547 = vsel %vm48, %v543, 0.0
    %548 = vadd.xlane.f32.xlu0 %v547
    %v549 = vpop.xlane.xlu0 %548
    %v550 = vmul.f32 %v546, %v55
    %v551 = vmul.f32 %v549, %v55
    %v552 = vadd.f32 %v550, 1e-05
    %v553 = vadd.f32 %v551, 1e-05
    %v554 = vrsqrt.pop %v552
    %v555 = vrsqrt.pop %v553
    %v556 = vmul.f32 %v540, %v554
    %v557 = vmul.f32 %v541, %v555
    %v558 = vlaneseq
    %v559 = vshrl.u32 %v558, 7
    %v560 = vsub.s32 5, %v559
    %v561 = vrot.slane %v35, %v560
    %v562 = vmul.f32 %v556, %v561
    %v563 = vmul.f32 %v557, %v561
    %v564 = vlaneseq
    %v565 = vshrl.u32 %v564, 7
    %v566 = vsub.s32 6, %v565
    %v567 = vrot.slane %v35, %v566
    %v568 = vadd.f32 %v562, %v567
    %v569 = vadd.f32 %v563, %v567
    %v570 = vld [vmem:[%s5] sm:$0xff]
    %v571 = vld [vmem:[%s5 + $0x8] sm:$0xff]
    %v572 = vld [vmem:[%s5 + $0x10] sm:$0xff]
    %v573 = vld [vmem:[%s5 + $0x18] sm:$0xff]
    %v574 = vld [vmem:[%s8] sm:$0x1]
    %v576 = vlaneseq
    %v577 = vshrl.u32 %v576, 7
    %v578 = vsub.s32 0, %v577
    %v579 = vrot.slane %v574, %v578
    %v582 = vsel %vm48, %v568, 0
    %v585 = vsel %vm48, %v569, 0
    %587 = vmatprep.subr.mxu0 0.0
    %588 = vmatpush1.msra.mxu0 %v570
    %589 = vmatprep.subr.mxu0 0.0
    %590 = vmatpush1.msra.mxu0 %v571
    %591 = vmatprep.subr.mxu0 0.0
    %592 = vmatpush1.msra.mxu0 %v572
    %593 = vmatprep.subr.mxu0 0.0
    %594 = vmatpush1.msra.mxu0 %v573
    %595 = vmatprep.subr.mxu0 0.0
    %596 = vmatpush1.msra.mxu0 0.0
    %597 = vmatprep.subr.mxu0 0.0
    %598 = vmatpush1.msra.mxu0 0.0
    %599 = vmatprep.subr.mxu0 0.0
    %600 = vmatpush1.msra.mxu0 0.0
    %601 = vmatprep.subr.mxu0 0.0
    %602 = vmatpush1.msra.mxu0 0.0
    %603 = vmatprep.subr.mxu0 0.0
    %604 = vmatpush1.msra.mxu0 0.0
    %605 = vmatprep.subr.mxu0 0.0
    %606 = vmatpush1.msra.mxu0 0.0
    %607 = vmatprep.subr.mxu0 0.0
    %608 = vmatpush1.msra.mxu0 0.0
    %609 = vmatprep.subr.mxu0 0.0
    %610 = vmatpush1.msra.mxu0 0.0
    %611 = vmatprep.subr.mxu0 0.0
    %612 = vmatpush1.msra.mxu0 0.0
    %613 = vmatprep.subr.mxu0 0.0
    %614 = vmatpush1.msra.mxu0 0.0
    %615 = vmatprep.subr.mxu0 0.0
    %616 = vmatpush1.msra.mxu0 0.0
    %617 = vmatprep.subr.mxu0 0.0
    %618 = vmatpush1.msra.mxu0 0.0
    %619 = vmatprep.subr.mxu0 0.0
    %620 = vmatpush1.msra.mxu0 0.0
    %621 = vmatprep.subr.mxu0 0.0
    %622 = vmatpush1.msra.mxu0 0.0
    %623 = vmatprep.subr.mxu0 0.0
    %624 = vmatpush1.msra.mxu0 0.0
    %625 = vmatprep.subr.mxu0 0.0
    %626 = vmatpush1.msra.mxu0 0.0
    %627 = vmatprep.subr.mxu0 0.0
    %628 = vmatpush1.msra.mxu0 0.0
    %629 = vmatprep.subr.mxu0 0.0
    %630 = vmatpush1.msra.mxu0 0.0
    %631 = vmatprep.subr.mxu0 0.0
    %632 = vmatpush1.msra.mxu0 0.0
    %633 = vmatprep.subr.mxu0 0.0
    %634 = vmatpush1.msra.mxu0 0.0
    %635 = vmatprep.subr.mxu0 0.0
    %636 = vmatpush1.msra.mxu0 0.0
    %637 = vmatprep.subr.mxu0 0.0
    %638 = vmatpush1.msra.mxu0 0.0
    %639 = vmatprep.subr.mxu0 0.0
    %640 = vmatpush1.msra.mxu0 0.0
    %641 = vmatprep.subr.mxu0 0.0
    %642 = vmatpush1.msra.mxu0 0.0
    %643 = vmatprep.subr.mxu0 0.0
    %644 = vmatpush1.msra.mxu0 0.0
    %645 = vmatprep.subr.mxu0 0.0
    %646 = vmatpush1.msra.mxu0 0.0
    %647 = vmatprep.subr.mxu0 0.0
    %648 = vmatpush1.msra.mxu0 0.0
    %649 = vmatprep.subr.mxu0 0.0
    %650 = vmatpush1.msra.mxu0 0.0
    %651 = vmatprep.mubr.f32.mxu0 0.0
    %652 = vmatmul.mubr.f32.gmra.mrb[0].mxu0 %v582
    %v653 = vpop.f32.mrb[0].mxu0
    %v654 = vadd.f32 %v579, %v653
    %v655 = vpop.f32.mrb[0].mxu0
    %656 = vmatprep.mubr.f32.mxu0 0.0
    %657 = vmatmul.mubr.f32.gmra.mrb[0].mxu0 %v585
    %v658 = vpop.f32.mrb[0].mxu0
    %v659 = vadd.f32 %v579, %v658
    %v660 = vpop.f32.mrb[0].mxu0
    %661 = vdwg.mxu0
    %v662 = vmul.f32 %v654, 0.5
    %v663 = vmul.f32 %v659, 0.5
    %v664 = vmul.f32 %v654, 0.70710677
    %v665 = vmul.f32 %v659, 0.70710677
    %v666 = vand.u32 2147483647, %v664
    %v667 = vand.u32 2147483647, %v665
    %v668 = vmul.f32 %v666, 0.3275911
    %v669 = vmul.f32 %v667, 0.3275911
    %v670 = vadd.f32 %v668, 1.0
    %v671 = vadd.f32 %v669, 1.0
    %v672 = vrcp.pop %v670
    %v673 = vmul.f32 1.0, %v672
    %v674 = vrcp.pop %v671
    %v675 = vmul.f32 1.0, %v674
    %v676 = vmul.f32 %v673, 1.0614054
    %v677 = vmul.f32 %v675, 1.0614054
    %v678 = vsub.f32 %v676, 1.4531521
    %v679 = vsub.f32 %v677, 1.4531521
    %v680 = vmul.f32 %v678, %v673
    %v681 = vmul.f32 %v679, %v675
    %v682 = vadd.f32 %v680, 1.4214138
    %v683 = vadd.f32 %v681, 1.4214138
    %v684 = vmul.f32 %v682, %v673
    %v685 = vmul.f32 %v683, %v675
    %v686 = vsub.f32 %v684, 0.28449672
    %v687 = vsub.f32 %v685, 0.28449672
    %v688 = vmul.f32 %v686, %v673
    %v689 = vmul.f32 %v687, %v675
    %v690 = vadd.f32 %v688, 0.2548296
    %v691 = vadd.f32 %v689, 0.2548296
    %v692 = vmul.f32 %v690, %v673
    %v693 = vmul.f32 %v691, %v675
    %v694 = vsub.f32 0.0, %v664
    %v695 = vsub.f32 0.0, %v665
    %v696 = vmul.f32 %v694, %v664
    %v697 = vmul.f32 %v695, %v665
    %v698 = vmul.f32 %v696, 1.442695
    %v699 = vpow.pop %v698
    %v700 = vmul.f32 %v697, 1.442695
    %v701 = vpow.pop %v700
    %v702 = vmul.f32 %v692, %v699
    %v703 = vmul.f32 %v693, %v701
    %v704 = vsub.f32 1.0, %v702
    %v705 = vsub.f32 1.0, %v703
    %vm706 = vcmp.ge.f32.partialorder %v664, 0.0
    %vm707 = vcmp.ge.f32.partialorder %v665, 0.0
    %v708 = vsub.f32 0.0, %v704
    %v709 = vsub.f32 0.0, %v705
    %v710 = vsel %vm706, %v704, %v708
    %v711 = vsel %vm707, %v705, %v709
    %v712 = vadd.f32 %v710, 1.0
    %v713 = vadd.f32 %v711, 1.0
    %v714 = vmul.f32 %v662, %v712
    %v715 = vmul.f32 %v663, %v713
    %v716 = vld [vmem:[%s6] sm:$0xff]
    %v717 = vld [vmem:[%s6 + $0x8] sm:$0xff]
    %v718 = vld [vmem:[%s6 + $0x10] sm:$0xff]
    %v719 = vld [vmem:[%s6 + $0x18] sm:$0xff]
    %v720 = vld [vmem:[%s6 + $0x20] sm:$0xff]
    %v721 = vld [vmem:[%s6 + $0x28] sm:$0xff]
    %v722 = vld [vmem:[%s6 + $0x30] sm:$0xff]
    %v723 = vld [vmem:[%s6 + $0x38] sm:$0xff]
    %v724 = vld [vmem:[%s6 + $0x40] sm:$0xff]
    %v725 = vld [vmem:[%s6 + $0x48] sm:$0xff]
    %v726 = vld [vmem:[%s6 + $0x50] sm:$0xff]
    %v727 = vld [vmem:[%s6 + $0x58] sm:$0xff]
    %v728 = vld [vmem:[%s6 + $0x60] sm:$0xff]
    %v729 = vld [vmem:[%s6 + $0x68] sm:$0xff]
    %v730 = vld [vmem:[%s6 + $0x70] sm:$0xff]
    %v731 = vld [vmem:[%s6 + $0x78] sm:$0xff]
    %732 = vmatprep.subr.mxu0 0.0
    %733 = vmatpush1.msra.mxu0 %v716
    %734 = vmatprep.subr.mxu0 0.0
    %735 = vmatpush1.msra.mxu0 %v717
    %736 = vmatprep.subr.mxu0 0.0
    %737 = vmatpush1.msra.mxu0 %v718
    %738 = vmatprep.subr.mxu0 0.0
    %739 = vmatpush1.msra.mxu0 %v719
    %740 = vmatprep.subr.mxu0 0.0
    %741 = vmatpush1.msra.mxu0 %v720
    %742 = vmatprep.subr.mxu0 0.0
    %743 = vmatpush1.msra.mxu0 %v721
    %744 = vmatprep.subr.mxu0 0.0
    %745 = vmatpush1.msra.mxu0 %v722
    %746 = vmatprep.subr.mxu0 0.0
    %747 = vmatpush1.msra.mxu0 %v723
    %748 = vmatprep.subr.mxu0 0.0
    %749 = vmatpush1.msra.mxu0 %v724
    %750 = vmatprep.subr.mxu0 0.0
    %751 = vmatpush1.msra.mxu0 %v725
    %752 = vmatprep.subr.mxu0 0.0
    %753 = vmatpush1.msra.mxu0 %v726
    %754 = vmatprep.subr.mxu0 0.0
    %755 = vmatpush1.msra.mxu0 %v727
    %756 = vmatprep.subr.mxu0 0.0
    %757 = vmatpush1.msra.mxu0 %v728
    %758 = vmatprep.subr.mxu0 0.0
    %759 = vmatpush1.msra.mxu0 %v729
    %760 = vmatprep.subr.mxu0 0.0
    %761 = vmatpush1.msra.mxu0 %v730
    %762 = vmatprep.subr.mxu0 0.0
    %763 = vmatpush1.msra.mxu0 %v731
    %764 = vmatprep.subr.mxu0 0.0
    %765 = vmatpush1.msra.mxu0 0.0
    %766 = vmatprep.subr.mxu0 0.0
    %767 = vmatpush1.msra.mxu0 0.0
    %768 = vmatprep.subr.mxu0 0.0
    %769 = vmatpush1.msra.mxu0 0.0
    %770 = vmatprep.subr.mxu0 0.0
    %771 = vmatpush1.msra.mxu0 0.0
    %772 = vmatprep.subr.mxu0 0.0
    %773 = vmatpush1.msra.mxu0 0.0
    %774 = vmatprep.subr.mxu0 0.0
    %775 = vmatpush1.msra.mxu0 0.0
    %776 = vmatprep.subr.mxu0 0.0
    %777 = vmatpush1.msra.mxu0 0.0
    %778 = vmatprep.subr.mxu0 0.0
    %779 = vmatpush1.msra.mxu0 0.0
    %780 = vmatprep.subr.mxu0 0.0
    %781 = vmatpush1.msra.mxu0 0.0
    %782 = vmatprep.subr.mxu0 0.0
    %783 = vmatpush1.msra.mxu0 0.0
    %784 = vmatprep.subr.mxu0 0.0
    %785 = vmatpush1.msra.mxu0 0.0
    %786 = vmatprep.subr.mxu0 0.0
    %787 = vmatpush1.msra.mxu0 0.0
    %788 = vmatprep.subr.mxu0 0.0
    %789 = vmatpush1.msra.mxu0 0.0
    %790 = vmatprep.subr.mxu0 0.0
    %791 = vmatpush1.msra.mxu0 0.0
    %792 = vmatprep.subr.mxu0 0.0
    %793 = vmatpush1.msra.mxu0 0.0
    %794 = vmatprep.subr.mxu0 0.0
    %795 = vmatpush1.msra.mxu0 0.0
    %796 = vmatprep.mubr.f32.mxu0 0.0
    %797 = vmatmul.mubr.f32.gmra.mrb[0].mxu0 %v714
    %v798 = vpop.f32.mrb[0].mxu0
    %v799 = vadd.f32 0.0, %v798
    %v800 = vpop.f32.mrb[0].mxu0
    %801 = vmatprep.mubr.f32.mxu0 0.0
    %802 = vmatmul.mubr.f32.gmra.mrb[0].mxu0 %v715
    %v803 = vpop.f32.mrb[0].mxu0
    %v804 = vadd.f32 0.0, %v803
    %v805 = vpop.f32.mrb[0].mxu0
    %806 = vdwg.mxu0
    %v807 = vadd.f32 %v530, %v799
    %v808 = vadd.f32 %v531, %v804
    %v809 = vlaneseq
    %v810 = vshrl.u32 %v809, 7
    %v811 = vsub.s32 7, %v810
    %v812 = vrot.slane %v35, %v811
    %v813 = vadd.f32 %v807, %v812
    %v814 = vadd.f32 %v808, %v812
    %815 = vst.msk [vmem:[#allocation2] sm:$0xff] %vm48, %v813
    %816 = vst.msk [vmem:[#allocation2 + $0x8] sm:$0xff] %vm48, %v814
    // Predicated region
    $region38: #{tpu_custom_call.1} parent=1 // pred_check
      _
    $region39: #{tpu_custom_call.1} parent=1 // pred_check_branch
      %818 = sbr.rel (0) target = $region41
    $region40: #{tpu_custom_call.1} parent=1 // pred_region
      %s820 = ssub.s32 256, 256
      %821 = vsyncadd [#allocation3], %s820
      %s822 = sshll.u32 [#allocation2], 4
      %s823 = int_to_ptr.vmem [resolvable:$true] %s822
      %828 = dma.vmem_to_hbm [thread:$0]  %s823, 256, %s9, [#allocation3], 128, 128, 8
    $region41: #{tpu_custom_call.1} parent=1 // pred_fallthru
      _
    // Predicated region
    $region42: #{tpu_custom_call.1} parent=1 // pred_check
      _
    $region43: #{tpu_custom_call.1} parent=1 // pred_check_branch
      %830 = sbr.rel (0) target = $region45
    $region44: #{tpu_custom_call.1} parent=1 // pred_region
      %831 = dma.done [#allocation3], 256
    $region45: #{tpu_custom_call.1} parent=1 // pred_fallthru
      _
    %832 = vsyncpa [#allocation3], 1

</llo_original>
